<compile_context>
chip_gen: v6e
topology: v6e:2x2x1
jax: 0.10.0
libtpu: 0.0.40
codegen_flags: <defaults>
</compile_context>

<pallas_src>
import jax
import jax.numpy as jnp
from jax.experimental import pallas as pl
from jax.experimental.pallas import tpu as pltpu


def _round_up(x, m):
    return ((x + m - 1) // m) * m


def _vmem_capacity_bytes():
    try:
        return int(pltpu.get_tpu_info().vmem_capacity_bytes)
    except Exception:
        return 64 << 20  # most conservative (v7x)


def _pick_tile(dim, cap, unit=128):
    """Tile for a lane (or K) dimension, avoiding padding where possible.

    Returns (tile, padded_dim).  Preference order:
      1. the full dim if it fits under `cap` (full-dim blocks are exempt from
         the (8,128) divisibility rule, and never require padding),
      2. the largest `unit`-multiple <= cap that divides dim exactly,
      3. fall back to `cap` with zero-padding (rare, odd dims only).
    """
    if dim <= cap:
        return dim, dim
    t = (cap // unit) * unit
    while t >= unit:
        if dim % t == 0:
            return t, dim
        t -= unit
    return cap, _round_up(dim, cap)


# ---------------------------------------------------------------------------
# Kernels
# ---------------------------------------------------------------------------
def _proj_kernel_single(x_ref, w_ref, o_ref):
    # Whole problem resident in VMEM: fused matmul + tanh, no grid loop.
    o_ref[...] = jnp.tanh(
        jnp.dot(x_ref[...], w_ref[...], preferred_element_type=jnp.float32)
    ).astype(o_ref.dtype)


def _proj_kernel_tiled(x_ref, w_ref, o_ref):
    # Grid = (M tiles, N tiles, K tiles); K innermost reduction.
    # The (tm, tn) f32 output tile is resident across the K axis (constant
    # output index_map on axis 2) -> accumulate directly into o_ref.
    k = pl.program_id(2)

    @pl.when(k == 0)
    def _():
        o_ref[...] = jnp.zeros_like(o_ref)

    o_ref[...] += jnp.dot(
        x_ref[...], w_ref[...], preferred_element_type=jnp.float32
    )

    @pl.when(k == pl.num_programs(2) - 1)
    def _():
        o_ref[...] = jnp.tanh(o_ref[...])


# ---------------------------------------------------------------------------
# Wrapper
# ---------------------------------------------------------------------------
def projection_layer_forward(x, weights, *, force_tiled=False):
    """ProjectionLayer.forward: tanh(x.reshape(B, -1) @ weights) -> (B, O) f32.

    `weights` may be stored persistently in bf16 (cast once at init, not per
    call) to halve the dominant weight HBM stream; accumulation stays f32.
    """
    B = x.shape[0]
    hid = 1
    for d in x.shape[1:]:
        hid *= d
    assert weights.shape[0] == hid
    O = weights.shape[1]

    # Matches torch .reshape(len(x), -1) on contiguous NCHW.
    x2d = x.reshape(B, hid)
    # Match x (tiny) to the stored weight dtype; do NOT touch weights here.
    if weights.dtype == jnp.bfloat16 and x2d.dtype != jnp.bfloat16:
        x2d = x2d.astype(jnp.bfloat16)
    # TODO(synk): fp8 weight streaming on v7x (needs per-tensor scale epilogue).

    xb = jnp.dtype(x2d.dtype).itemsize
    wb = jnp.dtype(weights.dtype).itemsize
    capacity = _vmem_capacity_bytes()

    cost = pl.CostEstimate(
        flops=2 * B * hid * O,
        transcendentals=B * O,
        bytes_accessed=xb * B * hid + wb * hid * O + 4 * B * O,
    )

    total_bytes = xb * B * hid + wb * hid * O + 4 * B * O
    if not force_tiled and total_bytes <= (24 << 20):
        # ---- Single-block fused path (the common case for this module) ----
        vmem_single = max(2 * total_bytes + (4 << 20), 16 << 20)
        vmem_single = min(vmem_single, capacity - (8 << 20))
        return pl.pallas_call(
            _proj_kernel_single,
            out_shape=jax.ShapeDtypeStruct((B, O), jnp.float32),
            in_specs=[
                pl.BlockSpec((B, hid), lambda: (0, 0)),
                pl.BlockSpec((hid, O), lambda: (0, 0)),
            ],
            out_specs=pl.BlockSpec((B, O), lambda: (0, 0)),
            compiler_params=pltpu.CompilerParams(vmem_limit_bytes=vmem_single),
            cost_estimate=cost,
        )(x2d, weights)

    # ---- Tiled path for large B / Hid / O ----
    # Per-generation caps: bigger K tiles on 128-MiB-VMEM parts (v5e/v6e).
    tk_cap = 2048 if capacity >= (100 << 20) else 1024
    tn_cap = 512
    tm_cap = 1024                       # Mp//tm == 1 for realistic B -> weights
                                        # streamed from HBM exactly once.
    m_unit = 16 if xb == 2 else 8       # bf16 packs 16 rows per vreg group.

    tm = min(tm_cap, _round_up(B, m_unit))
    tk, Kp = _pick_tile(hid, tk_cap)    # no weight padding for typical hid
    tn, Np = _pick_tile(O, tn_cap)      # no weight padding for typical O
    Mp = _round_up(B, tm)

    # Megacore occupancy: expose >=2 parallel tiles when cheap to do so.
    if (Mp // tm) * (Np // tn) == 1 and tn % 256 == 0 and Np % (tn // 2) == 0:
        tn //= 2

    # Only x (tiny) is padded; weights are padded only in the rare case where
    # hid/O have no 128-aligned divisor and exceed the tile caps.
    if (Mp, Kp) != x2d.shape:
        x2d = jnp.pad(x2d, ((0, Mp - B), (0, Kp - hid)))
    if (Kp, Np) != weights.shape:
        weights = jnp.pad(weights, ((0, Kp - hid), (0, Np - O)))

    grid = (Mp // tm, Np // tn, Kp // tk)

    # VMEM budget: double-buffered input tiles + resident f32 output tile,
    # plus headroom; keep well below physical capacity (never all of v7x's 64M).
    vmem_need = 2 * (tm * tk * xb + tk * tn * wb + tm * tn * 4) + (4 << 20)
    vmem_bytes = max(min(vmem_need, capacity - (12 << 20)), 16 << 20)

    out = pl.pallas_call(
        _proj_kernel_tiled,
        out_shape=jax.ShapeDtypeStruct((Mp, Np), jnp.float32),
        grid=grid,
        in_specs=[
            pl.BlockSpec((tm, tk), lambda i, j, k: (i, k)),
            pl.BlockSpec((tk, tn), lambda i, j, k: (k, j)),
        ],
        out_specs=pl.BlockSpec((tm, tn), lambda i, j, k: (i, j)),
        compiler_params=pltpu.CompilerParams(
            dimension_semantics=("parallel", "parallel", "arbitrary"),
            vmem_limit_bytes=vmem_bytes,
        ),
        cost_estimate=cost,
    )(x2d, weights)

    # Skip the post-slice when nothing was padded; slice only M when only M was.
    if Mp == B and Np == O:
        return out
    if Np == O:
        return out[:B]
    return out[:B, :O]


def projection_layer_forward_many(xs, weights):
    """Amortize per-call dispatch: run many small forward calls as ONE kernel.

    `xs` is a list of (Bi, C, H, W) (or (Bi, Hid)) arrays sharing `weights`.
    """
    sizes = [int(x.shape[0]) for x in xs]
    x_all = jnp.concatenate([x.reshape(x.shape[0], -1) for x in xs], axis=0)
    out = projection_layer_forward(x_all, weights)
    splits, off = [], 0
    for s in sizes[:-1]:
        off += s
        splits.append(off)
    return jnp.split(out, splits, axis=0)


if __name__ == "__main__":
    # Shapes consistent with the module: input_size = (B, C, H, W)
    B, C, H, W = 2, 4, 16, 16
    Hid = C * H * W          # 1024
    output_size = 128

    key = jax.random.PRNGKey(0)
    kx, kw = jax.random.split(key)

    x = jax.random.normal(kx, (B, C, H, W), dtype=jnp.float32)
    # torch.empty(...).normal_(mean=0.0, std=0.05) -> deterministic equivalent:
    weights = 0.05 * jax.random.normal(kw, (Hid, output_size), dtype=jnp.float32)

    ref = jnp.tanh(x.reshape(B, -1) @ weights)

    # Fast single-block fused path (used for these shapes).
    out = jax.block_until_ready(projection_layer_forward(x, weights))
    assert out.shape == (B, output_size)
    assert jnp.allclose(out, ref, atol=1e-5, rtol=1e-5)

    # Tiled path (used when B/Hid/O grow) — exercise it for correctness too.
    out_tiled = jax.block_until_ready(
        projection_layer_forward(x, weights, force_tiled=True)
    )
    assert jnp.allclose(out_tiled, ref, atol=1e-5, rtol=1e-5)

    # Persistent bf16 weights: cast ONCE here (i.e. at init, outside any jitted
    # step), never per call.  Looser tolerance is the documented tradeoff.
    w_bf16 = weights.astype(jnp.bfloat16)
    out_bf16 = jax.block_until_ready(projection_layer_forward(x, w_bf16))
    assert jnp.allclose(out_bf16, ref, atol=5e-2, rtol=5e-2)

    # Batched entry point: many tiny forward calls in one kernel launch.
    outs = projection_layer_forward_many([x, x + 1.0], weights)
    refs = [ref, jnp.tanh((x + 1.0).reshape(B, -1) @ weights)]
    for o, r in zip(outs, refs):
        assert jnp.allclose(jax.block_until_ready(o), r, atol=1e-5, rtol=1e-5)

    # TODO(synk): backward / update_gradient of ProjectionLayer are out of scope
    # for the forward-pass kernel.
    print("KERNEL_OK")
</pallas_src>

<mosaic_0001>
module attributes {stable_mosaic.version = 11 : i64} {
  func.func @_proj_kernel_single(%arg0: memref<2x1024xf32, #tpu.memory_space<vmem>>, %arg1: memref<1024x128xf32, #tpu.memory_space<vmem>>, %arg2: memref<2x128xf32, #tpu.memory_space<vmem>>) attributes {dimension_semantics = [], scalar_prefetch = 0 : i64, scratch_operands = 0 : i64, tpu.core_type = #tpu.core_type<tc>} {
    %c0 = arith.constant 0 : index
    %c0_0 = arith.constant 0 : index
    %0 = vector.load %arg0[%c0, %c0_0] : memref<2x1024xf32, #tpu.memory_space<vmem>>, vector<2x1024xf32>
    %c0_1 = arith.constant 0 : index
    %c0_2 = arith.constant 0 : index
    %1 = vector.load %arg1[%c0_1, %c0_2] : memref<1024x128xf32, #tpu.memory_space<vmem>>, vector<1024x128xf32>
    %cst = arith.constant dense<0.000000e+00> : vector<2x128xf32>
    %2 = tpu.matmul %0, %1, %cst {dimension_numbers = #tpu.dot_dimension_numbers<[1], [0], [0], [1], [0, 0, 1, 1], [], []>} : vector<2x1024xf32>, vector<1024x128xf32>, vector<2x128xf32> -> vector<2x128xf32>
    %3 = math.tanh %2 : vector<2x128xf32>
    %c0_3 = arith.constant 0 : index
    %c0_4 = arith.constant 0 : index
    %4 = vector.load %arg2[%c0_3, %c0_4] : memref<2x128xf32, #tpu.memory_space<vmem>>, vector<2x128xf32>
    tpu.vector_store %arg2[%c0_3, %c0_4], %3 {strides = array<i32>} : memref<2x128xf32, #tpu.memory_space<vmem>>, vector<2x128xf32>,
    return
  }
}

</mosaic_0001>

<llo_original>
// kernel: tpu_custom_call.1
$region0: #{tpu_custom_call.1}
  #allocation0 [shape = 'u32[]', space=smem, size = 0x4, offset = 0x4, fixed_abs, tag = 'smem constant byte address 0x4 - core index']
  #allocation1 [shape = 'u32[144,128]{1,0:T(1,128)}', space=vmem, size = 0x12000, scoped, tag = 'internal scratch']
  %s0 = inlined_call_operand.hbm [shape: f32[2,1024], index: 0, kind: input, shape index: {}]
  %s1 = inlined_call_operand.hbm [shape: f32[1024,128], index: 1, kind: input, shape index: {}]
  %s2 = inlined_call_operand.hbm [shape: f32[2,128], index: 2, kind: output, shape index: {}]
  %s3 = sld [smem:[#allocation0]]
  $region26: #{tpu_custom_call.1} parent=0
    _
  %s5 = ssub.s32 1, %s3
  %s6 = scalar_select 0, %s5, %s3
  $region1: #{tpu_custom_call.1} parent=0
    #allocation2 [shape = 'u8[8192]{0}', space=vmem, size = 0x2000, scoped, tag = 'input window, operand 0, single buffered']
    #allocation3 [shape = 's32[1]{0}', space=sflag, size = 0x4, scoped, tag = 'scoped memory for tpu_custom_call.1']
    #allocation4 [shape = 's32[1]{0}', space=sflag, size = 0x4, scoped, tag = 'scoped memory for tpu_custom_call.1']
    #allocation5 [shape = 'u8[524288]{0}', space=vmem, size = 0x80000, scoped, tag = 'input window, operand 1, single buffered']
    #allocation6 [shape = 's32[1]{0}', space=sflag, size = 0x4, scoped, tag = 'scoped memory for tpu_custom_call.1']
    #allocation7 [shape = 'u8[1024]{0}', space=vmem, size = 0x400, scoped, tag = 'output window, operand 0, single buffered']
    %7 = vsyncpa [#allocation3], 0
    %8 = vsyncpa [#allocation6], 0
    %9 = vsyncpa [#allocation4], 0
    // Predicated region
    $region2: #{tpu_custom_call.1} parent=1 // pred_check
      _
    $region3: #{tpu_custom_call.1} parent=1 // pred_check_branch
      %11 = sbr.rel (0) target = $region5
    $region4: #{tpu_custom_call.1} parent=1 // pred_region
      %s13 = ssub.s32 256, 256
      %14 = vsyncadd [#allocation3], %s13
      %s16 = sshll.u32 [#allocation2], 4
      %s17 = int_to_ptr.vmem [resolvable:$true] %s16
      %19 = dma.hbm_to_vmem [thread:$0]  %s0, 256, %s17, [#allocation3]
    $region5: #{tpu_custom_call.1} parent=1 // pred_fallthru
      _
    // Predicated region
    $region6: #{tpu_custom_call.1} parent=1 // pred_check
      _
    $region7: #{tpu_custom_call.1} parent=1 // pred_check_branch
      %21 = sbr.rel (0) target = $region9
    $region8: #{tpu_custom_call.1} parent=1 // pred_region
      %s23 = ssub.s32 16384, 16384
      %24 = vsyncadd [#allocation6], %s23
      %s25 = sshll.u32 [#allocation5], 4
      %s26 = int_to_ptr.vmem [resolvable:$true] %s25
      %31 = dma.hbm_to_vmem [thread:$0]  %s1, 16384, %s26, [#allocation6], 128, 128, 8
    $region9: #{tpu_custom_call.1} parent=1 // pred_fallthru
      _
    // Predicated region
    $region10: #{tpu_custom_call.1} parent=1 // pred_check
      _
    $region11: #{tpu_custom_call.1} parent=1 // pred_check_branch
      %33 = sbr.rel (0) target = $region13
    $region12: #{tpu_custom_call.1} parent=1 // pred_region
      %34 = dma.done [#allocation3], 256
    $region13: #{tpu_custom_call.1} parent=1 // pred_fallthru
      _
    // Predicated region
    $region14: #{tpu_custom_call.1} parent=1 // pred_check
      _
    $region15: #{tpu_custom_call.1} parent=1 // pred_check_branch
      %36 = sbr.rel (0) target = $region17
    $region16: #{tpu_custom_call.1} parent=1 // pred_region
      %37 = dma.done [#allocation6], 16384
    $region17: #{tpu_custom_call.1} parent=1 // pred_fallthru
      _
    %v38 = vld [vmem:[#allocation2] sm:$0xff]
    %v39 = vld [vmem:[#allocation2 + $0x8] sm:$0xff]
    %v40 = vld [vmem:[#allocation5] sm:$0xff]
    %v41 = vld [vmem:[#allocation5 + $0x8] sm:$0xff]
    %v42 = vld [vmem:[#allocation5 + $0x10] sm:$0xff]
    %v43 = vld [vmem:[#allocation5 + $0x18] sm:$0xff]
    %v44 = vld [vmem:[#allocation5 + $0x20] sm:$0xff]
    %v45 = vld [vmem:[#allocation5 + $0x28] sm:$0xff]
    %v46 = vld [vmem:[#allocation5 + $0x30] sm:$0xff]
    %v47 = vld [vmem:[#allocation5 + $0x38] sm:$0xff]
    %v48 = vld [vmem:[#allocation5 + $0x40] sm:$0xff]
    %v49 = vld [vmem:[#allocation5 + $0x48] sm:$0xff]
    %v50 = vld [vmem:[#allocation5 + $0x50] sm:$0xff]
    %v51 = vld [vmem:[#allocation5 + $0x58] sm:$0xff]
    %v52 = vld [vmem:[#allocation5 + $0x60] sm:$0xff]
    %v53 = vld [vmem:[#allocation5 + $0x68] sm:$0xff]
    %v54 = vld [vmem:[#allocation5 + $0x70] sm:$0xff]
    %v55 = vld [vmem:[#allocation5 + $0x78] sm:$0xff]
    %v56 = vld [vmem:[#allocation5 + $0x80] sm:$0xff]
    %v57 = vld [vmem:[#allocation5 + $0x88] sm:$0xff]
    %v58 = vld [vmem:[#allocation5 + $0x90] sm:$0xff]
    %v59 = vld [vmem:[#allocation5 + $0x98] sm:$0xff]
    %v60 = vld [vmem:[#allocation5 + $0xa0] sm:$0xff]
    %v61 = vld [vmem:[#allocation5 + $0xa8] sm:$0xff]
    %v62 = vld [vmem:[#allocation5 + $0xb0] sm:$0xff]
    %v63 = vld [vmem:[#allocation5 + $0xb8] sm:$0xff]
    %v64 = vld [vmem:[#allocation5 + $0xc0] sm:$0xff]
    %v65 = vld [vmem:[#allocation5 + $0xc8] sm:$0xff]
    %v66 = vld [vmem:[#allocation5 + $0xd0] sm:$0xff]
    %v67 = vld [vmem:[#allocation5 + $0xd8] sm:$0xff]
    %v68 = vld [vmem:[#allocation5 + $0xe0] sm:$0xff]
    %v69 = vld [vmem:[#allocation5 + $0xe8] sm:$0xff]
    %v70 = vld [vmem:[#allocation5 + $0xf0] sm:$0xff]
    %v71 = vld [vmem:[#allocation5 + $0xf8] sm:$0xff]
    %v72 = vld [vmem:[#allocation5 + $0x100] sm:$0xff]
    %v73 = vld [vmem:[#allocation5 + $0x108] sm:$0xff]
    %v74 = vld [vmem:[#allocation5 + $0x110] sm:$0xff]
    %v75 = vld [vmem:[#allocation5 + $0x118] sm:$0xff]
    %v76 = vld [vmem:[#allocation5 + $0x120] sm:$0xff]
    %v77 = vld [vmem:[#allocation5 + $0x128] sm:$0xff]
    %v78 = vld [vmem:[#allocation5 + $0x130] sm:$0xff]
    %v79 = vld [vmem:[#allocation5 + $0x138] sm:$0xff]
    %v80 = vld [vmem:[#allocation5 + $0x140] sm:$0xff]
    %v81 = vld [vmem:[#allocation5 + $0x148] sm:$0xff]
    %v82 = vld [vmem:[#allocation5 + $0x150] sm:$0xff]
    %v83 = vld [vmem:[#allocation5 + $0x158] sm:$0xff]
    %v84 = vld [vmem:[#allocation5 + $0x160] sm:$0xff]
    %v85 = vld [vmem:[#allocation5 + $0x168] sm:$0xff]
    %v86 = vld [vmem:[#allocation5 + $0x170] sm:$0xff]
    %v87 = vld [vmem:[#allocation5 + $0x178] sm:$0xff]
    %v88 = vld [vmem:[#allocation5 + $0x180] sm:$0xff]
    %v89 = vld [vmem:[#allocation5 + $0x188] sm:$0xff]
    %v90 = vld [vmem:[#allocation5 + $0x190] sm:$0xff]
    %v91 = vld [vmem:[#allocation5 + $0x198] sm:$0xff]
    %v92 = vld [vmem:[#allocation5 + $0x1a0] sm:$0xff]
    %v93 = vld [vmem:[#allocation5 + $0x1a8] sm:$0xff]
    %v94 = vld [vmem:[#allocation5 + $0x1b0] sm:$0xff]
    %v95 = vld [vmem:[#allocation5 + $0x1b8] sm:$0xff]
    %v96 = vld [vmem:[#allocation5 + $0x1c0] sm:$0xff]
    %v97 = vld [vmem:[#allocation5 + $0x1c8] sm:$0xff]
    %v98 = vld [vmem:[#allocation5 + $0x1d0] sm:$0xff]
    %v99 = vld [vmem:[#allocation5 + $0x1d8] sm:$0xff]
    %v100 = vld [vmem:[#allocation5 + $0x1e0] sm:$0xff]
    %v101 = vld [vmem:[#allocation5 + $0x1e8] sm:$0xff]
    %v102 = vld [vmem:[#allocation5 + $0x1f0] sm:$0xff]
    %v103 = vld [vmem:[#allocation5 + $0x1f8] sm:$0xff]
    %v104 = vld [vmem:[#allocation5 + $0x200] sm:$0xff]
    %v105 = vld [vmem:[#allocation5 + $0x208] sm:$0xff]
    %v106 = vld [vmem:[#allocation5 + $0x210] sm:$0xff]
    %v107 = vld [vmem:[#allocation5 + $0x218] sm:$0xff]
    %v108 = vld [vmem:[#allocation5 + $0x220] sm:$0xff]
    %v109 = vld [vmem:[#allocation5 + $0x228] sm:$0xff]
    %v110 = vld [vmem:[#allocation5 + $0x230] sm:$0xff]
    %v111 = vld [vmem:[#allocation5 + $0x238] sm:$0xff]
    %v112 = vld [vmem:[#allocation5 + $0x240] sm:$0xff]
    %v113 = vld [vmem:[#allocation5 + $0x248] sm:$0xff]
    %v114 = vld [vmem:[#allocation5 + $0x250] sm:$0xff]
    %v115 = vld [vmem:[#allocation5 + $0x258] sm:$0xff]
    %v116 = vld [vmem:[#allocation5 + $0x260] sm:$0xff]
    %v117 = vld [vmem:[#allocation5 + $0x268] sm:$0xff]
    %v118 = vld [vmem:[#allocation5 + $0x270] sm:$0xff]
    %v119 = vld [vmem:[#allocation5 + $0x278] sm:$0xff]
    %v120 = vld [vmem:[#allocation5 + $0x280] sm:$0xff]
    %v121 = vld [vmem:[#allocation5 + $0x288] sm:$0xff]
    %v122 = vld [vmem:[#allocation5 + $0x290] sm:$0xff]
    %v123 = vld [vmem:[#allocation5 + $0x298] sm:$0xff]
    %v124 = vld [vmem:[#allocation5 + $0x2a0] sm:$0xff]
    %v125 = vld [vmem:[#allocation5 + $0x2a8] sm:$0xff]
    %v126 = vld [vmem:[#allocation5 + $0x2b0] sm:$0xff]
    %v127 = vld [vmem:[#allocation5 + $0x2b8] sm:$0xff]
    %v128 = vld [vmem:[#allocation5 + $0x2c0] sm:$0xff]
    %v129 = vld [vmem:[#allocation5 + $0x2c8] sm:$0xff]
    %v130 = vld [vmem:[#allocation5 + $0x2d0] sm:$0xff]
    %v131 = vld [vmem:[#allocation5 + $0x2d8] sm:$0xff]
    %v132 = vld [vmem:[#allocation5 + $0x2e0] sm:$0xff]
    %v133 = vld [vmem:[#allocation5 + $0x2e8] sm:$0xff]
    %v134 = vld [vmem:[#allocation5 + $0x2f0] sm:$0xff]
    %v135 = vld [vmem:[#allocation5 + $0x2f8] sm:$0xff]
    %v136 = vld [vmem:[#allocation5 + $0x300] sm:$0xff]
    %v137 = vld [vmem:[#allocation5 + $0x308] sm:$0xff]
    %v138 = vld [vmem:[#allocation5 + $0x310] sm:$0xff]
    %v139 = vld [vmem:[#allocation5 + $0x318] sm:$0xff]
    %v140 = vld [vmem:[#allocation5 + $0x320] sm:$0xff]
    %v141 = vld [vmem:[#allocation5 + $0x328] sm:$0xff]
    %v142 = vld [vmem:[#allocation5 + $0x330] sm:$0xff]
    %v143 = vld [vmem:[#allocation5 + $0x338] sm:$0xff]
    %v144 = vld [vmem:[#allocation5 + $0x340] sm:$0xff]
    %v145 = vld [vmem:[#allocation5 + $0x348] sm:$0xff]
    %v146 = vld [vmem:[#allocation5 + $0x350] sm:$0xff]
    %v147 = vld [vmem:[#allocation5 + $0x358] sm:$0xff]
    %v148 = vld [vmem:[#allocation5 + $0x360] sm:$0xff]
    %v149 = vld [vmem:[#allocation5 + $0x368] sm:$0xff]
    %v150 = vld [vmem:[#allocation5 + $0x370] sm:$0xff]
    %v151 = vld [vmem:[#allocation5 + $0x378] sm:$0xff]
    %v152 = vld [vmem:[#allocation5 + $0x380] sm:$0xff]
    %v153 = vld [vmem:[#allocation5 + $0x388] sm:$0xff]
    %v154 = vld [vmem:[#allocation5 + $0x390] sm:$0xff]
    %v155 = vld [vmem:[#allocation5 + $0x398] sm:$0xff]
    %v156 = vld [vmem:[#allocation5 + $0x3a0] sm:$0xff]
    %v157 = vld [vmem:[#allocation5 + $0x3a8] sm:$0xff]
    %v158 = vld [vmem:[#allocation5 + $0x3b0] sm:$0xff]
    %v159 = vld [vmem:[#allocation5 + $0x3b8] sm:$0xff]
    %v160 = vld [vmem:[#allocation5 + $0x3c0] sm:$0xff]
    %v161 = vld [vmem:[#allocation5 + $0x3c8] sm:$0xff]
    %v162 = vld [vmem:[#allocation5 + $0x3d0] sm:$0xff]
    %v163 = vld [vmem:[#allocation5 + $0x3d8] sm:$0xff]
    %v164 = vld [vmem:[#allocation5 + $0x3e0] sm:$0xff]
    %v165 = vld [vmem:[#allocation5 + $0x3e8] sm:$0xff]
    %v166 = vld [vmem:[#allocation5 + $0x3f0] sm:$0xff]
    %v167 = vld [vmem:[#allocation5 + $0x3f8] sm:$0xff]
    %v170 = vcombine.high %v38, %v38
    %v172 = vunpack.c.l.s4 1983009808
    %v173 = vunpack.c.0.s8 %v172
    %v174 = vlaneseq
    %v175 = vshrl.u32 %v174, 7
    %v176 = vsub.s32 %v173, %v175
    %v177 = vrot.slane %v38, %v176
    %v179 = vunpack.c.l.s4 1983009808
    %v180 = vunpack.c.0.s8 %v179
    %v181 = vlaneseq
    %v182 = vshrl.u32 %v181, 7
    %v183 = vsub.s32 %v180, %v182
    %v184 = vrot.slane %v170, %v183
    %v185 = vcombine.high %v177, %v177
    %v186 = vcombine.high %v184, %v184
    %v187 = vcombine.high %v39, %v39
    %v189 = vunpack.c.l.s4 1983009808
    %v190 = vunpack.c.0.s8 %v189
    %v191 = vlaneseq
    %v192 = vshrl.u32 %v191, 7
    %v193 = vsub.s32 %v190, %v192
    %v194 = vrot.slane %v39, %v193
    %v196 = vunpack.c.l.s4 1983009808
    %v197 = vunpack.c.0.s8 %v196
    %v198 = vlaneseq
    %v199 = vshrl.u32 %v198, 7
    %v200 = vsub.s32 %v197, %v199
    %v201 = vrot.slane %v187, %v200
    %v202 = vcombine.high %v194, %v194
    %v203 = vcombine.high %v201, %v201
    %212 = vmatprep.subr.mxu0 0.0
    %213 = vmatpush1.msra.mxu0 %v55
    %214 = vmatprep.subr.mxu0 0.0
    %215 = vmatpush1.msra.mxu0 %v54
    %216 = vmatprep.subr.mxu0 0.0
    %217 = vmatpush1.msra.mxu0 %v53
    %218 = vmatprep.subr.mxu0 0.0
    %219 = vmatpush1.msra.mxu0 %v52
    %220 = vmatprep.subr.mxu0 0.0
    %221 = vmatpush1.msra.mxu0 %v51
    %222 = vmatprep.subr.mxu0 0.0
    %223 = vmatpush1.msra.mxu0 %v50
    %224 = vmatprep.subr.mxu0 0.0
    %225 = vmatpush1.msra.mxu0 %v49
    %226 = vmatprep.subr.mxu0 0.0
    %227 = vmatpush1.msra.mxu0 %v48
    %228 = vmatprep.subr.mxu0 0.0
    %229 = vmatpush1.msra.mxu0 %v47
    %230 = vmatprep.subr.mxu0 0.0
    %231 = vmatpush1.msra.mxu0 %v46
    %232 = vmatprep.subr.mxu0 0.0
    %233 = vmatpush1.msra.mxu0 %v45
    %234 = vmatprep.subr.mxu0 0.0
    %235 = vmatpush1.msra.mxu0 %v44
    %236 = vmatprep.subr.mxu0 0.0
    %237 = vmatpush1.msra.mxu0 %v43
    %238 = vmatprep.subr.mxu0 0.0
    %239 = vmatpush1.msra.mxu0 %v42
    %240 = vmatprep.subr.mxu0 0.0
    %241 = vmatpush1.msra.mxu0 %v41
    %242 = vmatprep.subr.mxu0 0.0
    %243 = vmatpush1.msra.mxu0 %v40
    %244 = vmatprep.subr.mxu0 0.0
    %245 = vmatpush2.msra.mxu0 %v71
    %246 = vmatprep.subr.mxu0 0.0
    %247 = vmatpush2.msra.mxu0 %v70
    %248 = vmatprep.subr.mxu0 0.0
    %249 = vmatpush2.msra.mxu0 %v69
    %250 = vmatprep.subr.mxu0 0.0
    %251 = vmatpush2.msra.mxu0 %v68
    %252 = vmatprep.subr.mxu0 0.0
    %253 = vmatpush2.msra.mxu0 %v67
    %254 = vmatprep.subr.mxu0 0.0
    %255 = vmatpush2.msra.mxu0 %v66
    %256 = vmatprep.subr.mxu0 0.0
    %257 = vmatpush2.msra.mxu0 %v65
    %258 = vmatprep.subr.mxu0 0.0
    %259 = vmatpush2.msra.mxu0 %v64
    %260 = vmatprep.subr.mxu0 0.0
    %261 = vmatpush2.msra.mxu0 %v63
    %262 = vmatprep.subr.mxu0 0.0
    %263 = vmatpush2.msra.mxu0 %v62
    %264 = vmatprep.subr.mxu0 0.0
    %265 = vmatpush2.msra.mxu0 %v61
    %266 = vmatprep.subr.mxu0 0.0
    %267 = vmatpush2.msra.mxu0 %v60
    %268 = vmatprep.subr.mxu0 0.0
    %269 = vmatpush2.msra.mxu0 %v59
    %270 = vmatprep.subr.mxu0 0.0
    %271 = vmatpush2.msra.mxu0 %v58
    %272 = vmatprep.subr.mxu0 0.0
    %273 = vmatpush2.msra.mxu0 %v57
    %274 = vmatprep.subr.mxu0 0.0
    %275 = vmatpush2.msra.mxu0 %v56
    %276 = vmatprep.mubr.f32.mxu0 %v185
    %277 = vmatmul.mubr.f32.gmra.mxu0 %v177
    %v278 = vpop.f32.mrf.mxu0
    %v279 = vadd.f32 0.0, %v278
    %v280 = vpop.f32.mrf.mxu0
    %281 = vdwg.mxu0
    %282 = vmatprep.subr.mxu0 0.0
    %283 = vmatpush1.msra.mxu0 %v87
    %284 = vmatprep.subr.mxu0 0.0
    %285 = vmatpush1.msra.mxu0 %v86
    %286 = vmatprep.subr.mxu0 0.0
    %287 = vmatpush1.msra.mxu0 %v85
    %288 = vmatprep.subr.mxu0 0.0
    %289 = vmatpush1.msra.mxu0 %v84
    %290 = vmatprep.subr.mxu0 0.0
    %291 = vmatpush1.msra.mxu0 %v83
    %292 = vmatprep.subr.mxu0 0.0
    %293 = vmatpush1.msra.mxu0 %v82
    %294 = vmatprep.subr.mxu0 0.0
    %295 = vmatpush1.msra.mxu0 %v81
    %296 = vmatprep.subr.mxu0 0.0
    %297 = vmatpush1.msra.mxu0 %v80
    %298 = vmatprep.subr.mxu0 0.0
    %299 = vmatpush1.msra.mxu0 %v79
    %300 = vmatprep.subr.mxu0 0.0
    %301 = vmatpush1.msra.mxu0 %v78
    %302 = vmatprep.subr.mxu0 0.0
    %303 = vmatpush1.msra.mxu0 %v77
    %304 = vmatprep.subr.mxu0 0.0
    %305 = vmatpush1.msra.mxu0 %v76
    %306 = vmatprep.subr.mxu0 0.0
    %307 = vmatpush1.msra.mxu0 %v75
    %308 = vmatprep.subr.mxu0 0.0
    %309 = vmatpush1.msra.mxu0 %v74
    %310 = vmatprep.subr.mxu0 0.0
    %311 = vmatpush1.msra.mxu0 %v73
    %312 = vmatprep.subr.mxu0 0.0
    %313 = vmatpush1.msra.mxu0 %v72
    %314 = vmatprep.subr.mxu0 0.0
    %315 = vmatpush2.msra.mxu0 %v103
    %316 = vmatprep.subr.mxu0 0.0
    %317 = vmatpush2.msra.mxu0 %v102
    %318 = vmatprep.subr.mxu0 0.0
    %319 = vmatpush2.msra.mxu0 %v101
    %320 = vmatprep.subr.mxu0 0.0
    %321 = vmatpush2.msra.mxu0 %v100
    %322 = vmatprep.subr.mxu0 0.0
    %323 = vmatpush2.msra.mxu0 %v99
    %324 = vmatprep.subr.mxu0 0.0
    %325 = vmatpush2.msra.mxu0 %v98
    %326 = vmatprep.subr.mxu0 0.0
    %327 = vmatpush2.msra.mxu0 %v97
    %328 = vmatprep.subr.mxu0 0.0
    %329 = vmatpush2.msra.mxu0 %v96
    %330 = vmatprep.subr.mxu0 0.0
    %331 = vmatpush2.msra.mxu0 %v95
    %332 = vmatprep.subr.mxu0 0.0
    %333 = vmatpush2.msra.mxu0 %v94
    %334 = vmatprep.subr.mxu0 0.0
    %335 = vmatpush2.msra.mxu0 %v93
    %336 = vmatprep.subr.mxu0 0.0
    %337 = vmatpush2.msra.mxu0 %v92
    %338 = vmatprep.subr.mxu0 0.0
    %339 = vmatpush2.msra.mxu0 %v91
    %340 = vmatprep.subr.mxu0 0.0
    %341 = vmatpush2.msra.mxu0 %v90
    %342 = vmatprep.subr.mxu0 0.0
    %343 = vmatpush2.msra.mxu0 %v89
    %344 = vmatprep.subr.mxu0 0.0
    %345 = vmatpush2.msra.mxu0 %v88
    %346 = vmatprep.mubr.f32.mxu0 %v186
    %347 = vmatmul.mubr.f32.gmra.mxu0 %v184
    %v348 = vpop.f32.mrf.mxu0
    %v349 = vadd.f32 %v279, %v348
    %v350 = vpop.f32.mrf.mxu0
    %351 = vdwg.mxu0
    %352 = vmatprep.subr.mxu0 0.0
    %353 = vmatpush1.msra.mxu0 %v119
    %354 = vmatprep.subr.mxu0 0.0
    %355 = vmatpush1.msra.mxu0 %v118
    %356 = vmatprep.subr.mxu0 0.0
    %357 = vmatpush1.msra.mxu0 %v117
    %358 = vmatprep.subr.mxu0 0.0
    %359 = vmatpush1.msra.mxu0 %v116
    %360 = vmatprep.subr.mxu0 0.0
    %361 = vmatpush1.msra.mxu0 %v115
    %362 = vmatprep.subr.mxu0 0.0
    %363 = vmatpush1.msra.mxu0 %v114
    %364 = vmatprep.subr.mxu0 0.0
    %365 = vmatpush1.msra.mxu0 %v113
    %366 = vmatprep.subr.mxu0 0.0
    %367 = vmatpush1.msra.mxu0 %v112
    %368 = vmatprep.subr.mxu0 0.0
    %369 = vmatpush1.msra.mxu0 %v111
    %370 = vmatprep.subr.mxu0 0.0
    %371 = vmatpush1.msra.mxu0 %v110
    %372 = vmatprep.subr.mxu0 0.0
    %373 = vmatpush1.msra.mxu0 %v109
    %374 = vmatprep.subr.mxu0 0.0
    %375 = vmatpush1.msra.mxu0 %v108
    %376 = vmatprep.subr.mxu0 0.0
    %377 = vmatpush1.msra.mxu0 %v107
    %378 = vmatprep.subr.mxu0 0.0
    %379 = vmatpush1.msra.mxu0 %v106
    %380 = vmatprep.subr.mxu0 0.0
    %381 = vmatpush1.msra.mxu0 %v105
    %382 = vmatprep.subr.mxu0 0.0
    %383 = vmatpush1.msra.mxu0 %v104
    %384 = vmatprep.subr.mxu0 0.0
    %385 = vmatpush2.msra.mxu0 %v135
    %386 = vmatprep.subr.mxu0 0.0
    %387 = vmatpush2.msra.mxu0 %v134
    %388 = vmatprep.subr.mxu0 0.0
    %389 = vmatpush2.msra.mxu0 %v133
    %390 = vmatprep.subr.mxu0 0.0
    %391 = vmatpush2.msra.mxu0 %v132
    %392 = vmatprep.subr.mxu0 0.0
    %393 = vmatpush2.msra.mxu0 %v131
    %394 = vmatprep.subr.mxu0 0.0
    %395 = vmatpush2.msra.mxu0 %v130
    %396 = vmatprep.subr.mxu0 0.0
    %397 = vmatpush2.msra.mxu0 %v129
    %398 = vmatprep.subr.mxu0 0.0
    %399 = vmatpush2.msra.mxu0 %v128
    %400 = vmatprep.subr.mxu0 0.0
    %401 = vmatpush2.msra.mxu0 %v127
    %402 = vmatprep.subr.mxu0 0.0
    %403 = vmatpush2.msra.mxu0 %v126
    %404 = vmatprep.subr.mxu0 0.0
    %405 = vmatpush2.msra.mxu0 %v125
    %406 = vmatprep.subr.mxu0 0.0
    %407 = vmatpush2.msra.mxu0 %v124
    %408 = vmatprep.subr.mxu0 0.0
    %409 = vmatpush2.msra.mxu0 %v123
    %410 = vmatprep.subr.mxu0 0.0
    %411 = vmatpush2.msra.mxu0 %v122
    %412 = vmatprep.subr.mxu0 0.0
    %413 = vmatpush2.msra.mxu0 %v121
    %414 = vmatprep.subr.mxu0 0.0
    %415 = vmatpush2.msra.mxu0 %v120
    %416 = vmatprep.mubr.f32.mxu0 %v202
    %417 = vmatmul.mubr.f32.gmra.mxu0 %v194
    %v418 = vpop.f32.mrf.mxu0
    %v419 = vadd.f32 %v349, %v418
    %v420 = vpop.f32.mrf.mxu0
    %421 = vdwg.mxu0
    %422 = vmatprep.subr.mxu0 0.0
    %423 = vmatpush1.msra.mxu0 %v151
    %424 = vmatprep.subr.mxu0 0.0
    %425 = vmatpush1.msra.mxu0 %v150
    %426 = vmatprep.subr.mxu0 0.0
    %427 = vmatpush1.msra.mxu0 %v149
    %428 = vmatprep.subr.mxu0 0.0
    %429 = vmatpush1.msra.mxu0 %v148
    %430 = vmatprep.subr.mxu0 0.0
    %431 = vmatpush1.msra.mxu0 %v147
    %432 = vmatprep.subr.mxu0 0.0
    %433 = vmatpush1.msra.mxu0 %v146
    %434 = vmatprep.subr.mxu0 0.0
    %435 = vmatpush1.msra.mxu0 %v145
    %436 = vmatprep.subr.mxu0 0.0
    %437 = vmatpush1.msra.mxu0 %v144
    %438 = vmatprep.subr.mxu0 0.0
    %439 = vmatpush1.msra.mxu0 %v143
    %440 = vmatprep.subr.mxu0 0.0
    %441 = vmatpush1.msra.mxu0 %v142
    %442 = vmatprep.subr.mxu0 0.0
    %443 = vmatpush1.msra.mxu0 %v141
    %444 = vmatprep.subr.mxu0 0.0
    %445 = vmatpush1.msra.mxu0 %v140
    %446 = vmatprep.subr.mxu0 0.0
    %447 = vmatpush1.msra.mxu0 %v139
    %448 = vmatprep.subr.mxu0 0.0
    %449 = vmatpush1.msra.mxu0 %v138
    %450 = vmatprep.subr.mxu0 0.0
    %451 = vmatpush1.msra.mxu0 %v137
    %452 = vmatprep.subr.mxu0 0.0
    %453 = vmatpush1.msra.mxu0 %v136
    %454 = vmatprep.subr.mxu0 0.0
    %455 = vmatpush2.msra.mxu0 %v167
    %456 = vmatprep.subr.mxu0 0.0
    %457 = vmatpush2.msra.mxu0 %v166
    %458 = vmatprep.subr.mxu0 0.0
    %459 = vmatpush2.msra.mxu0 %v165
    %460 = vmatprep.subr.mxu0 0.0
    %461 = vmatpush2.msra.mxu0 %v164
    %462 = vmatprep.subr.mxu0 0.0
    %463 = vmatpush2.msra.mxu0 %v163
    %464 = vmatprep.subr.mxu0 0.0
    %465 = vmatpush2.msra.mxu0 %v162
    %466 = vmatprep.subr.mxu0 0.0
    %467 = vmatpush2.msra.mxu0 %v161
    %468 = vmatprep.subr.mxu0 0.0
    %469 = vmatpush2.msra.mxu0 %v160
    %470 = vmatprep.subr.mxu0 0.0
    %471 = vmatpush2.msra.mxu0 %v159
    %472 = vmatprep.subr.mxu0 0.0
    %473 = vmatpush2.msra.mxu0 %v158
    %474 = vmatprep.subr.mxu0 0.0
    %475 = vmatpush2.msra.mxu0 %v157
    %476 = vmatprep.subr.mxu0 0.0
    %477 = vmatpush2.msra.mxu0 %v156
    %478 = vmatprep.subr.mxu0 0.0
    %479 = vmatpush2.msra.mxu0 %v155
    %480 = vmatprep.subr.mxu0 0.0
    %481 = vmatpush2.msra.mxu0 %v154
    %482 = vmatprep.subr.mxu0 0.0
    %483 = vmatpush2.msra.mxu0 %v153
    %484 = vmatprep.subr.mxu0 0.0
    %485 = vmatpush2.msra.mxu0 %v152
    %486 = vmatprep.mubr.f32.mxu0 %v203
    %487 = vmatmul.mubr.f32.gmra.mxu0 %v201
    %v488 = vpop.f32.mrf.mxu0
    %v489 = vadd.f32 %v419, %v488
    %v490 = vpop.f32.mrf.mxu0
    %491 = vdwg.mxu0
    %v492 = vtanh.pop %v489
    %493 = vst [vmem:[#allocation7] sm:$0x3] %v492
    // Predicated region
    $region18: #{tpu_custom_call.1} parent=1 // pred_check
      _
    $region19: #{tpu_custom_call.1} parent=1 // pred_check_branch
      %495 = sbr.rel (0) target = $region21
    $region20: #{tpu_custom_call.1} parent=1 // pred_region
      %s497 = ssub.s32 32, 32
      %498 = vsyncadd [#allocation4], %s497
      %s500 = sshll.u32 [#allocation7], 4
      %s501 = int_to_ptr.vmem [resolvable:$true] %s500
      %503 = dma.vmem_to_hbm [thread:$0]  %s501, 32, %s2, [#allocation4]
    $region21: #{tpu_custom_call.1} parent=1 // pred_fallthru
      _
    // Predicated region
    $region22: #{tpu_custom_call.1} parent=1 // pred_check
      _
    $region23: #{tpu_custom_call.1} parent=1 // pred_check_branch
      %505 = sbr.rel (0) target = $region25
    $region24: #{tpu_custom_call.1} parent=1 // pred_region
      %506 = dma.done [#allocation4], 32
    $region25: #{tpu_custom_call.1} parent=1 // pred_fallthru
      _
    %507 = vsyncpa [#allocation3], 1
    %508 = vsyncpa [#allocation6], 1
    %509 = vsyncpa [#allocation4], 1

</llo_original>
